<compile_context>
chip_gen: v5e
topology: v5e:2x2
jax: 0.10.0
libtpu: 0.0.40
codegen_flags: <defaults>
</compile_context>

<pallas_src>
import jax
import jax.numpy as jnp
from jax.experimental import pallas as pl
from jax.experimental.pallas import tpu as pltpu


_MiB = 1024 * 1024
# ~2 MiB per pipelined input buffer: past the ~1 MiB roofline knee, and
# 2 inputs x 2 pipeline buffers x 2 MiB = 8 MiB resident fits every generation.
_PER_BUFFER_BYTES = 2 * _MiB


def _round_up(n, m):
    return ((n + m - 1) // m) * m


# ---------------------------------------------------------------------------
# Kernels
# ---------------------------------------------------------------------------

def _lsl_batch_major_kernel(x_ref, t_ref, o_ref):
    """x_ref, t_ref: (rows, C) tiles; o_ref: (rows, 1) per-row sum(t*log_softmax(x))."""
    x = x_ref[...].astype(jnp.float32)
    t = t_ref[...].astype(jnp.float32)
    # Numerically stable log-softmax pieces along the class axis (dim=1).
    m = jnp.max(x, axis=1, keepdims=True)                        # (rows, 1)
    z = x - m                                                    # (rows, C)
    lse = jnp.log(jnp.sum(jnp.exp(z), axis=1, keepdims=True))    # (rows, 1)
    # sum(t * (z - lse)) == sum(t*z) - lse*sum(t): never materialize logp.
    sum_t = jnp.sum(t, axis=1, keepdims=True)                    # do NOT assume ==1
    sum_tz = jnp.sum(t * z, axis=1, keepdims=True)
    o_ref[...] = sum_tz - lse * sum_t                            # (rows, 1)


def _lsl_class_major_kernel(x_ref, t_ref, o_ref):
    """x_ref, t_ref: (C, cols) lane-dense tiles; o_ref: (1, cols)."""
    x = x_ref[...].astype(jnp.float32)
    t = t_ref[...].astype(jnp.float32)
    m = jnp.max(x, axis=0, keepdims=True)                        # (1, cols)
    z = x - m                                                    # (C, cols)
    lse = jnp.log(jnp.sum(jnp.exp(z), axis=0, keepdims=True))    # (1, cols)
    sum_t = jnp.sum(t, axis=0, keepdims=True)
    sum_tz = jnp.sum(t * z, axis=0, keepdims=True)
    o_ref[...] = sum_tz - lse * sum_t                            # (1, cols)


# ---------------------------------------------------------------------------
# Wrappers
# ---------------------------------------------------------------------------

def _compiler_params(block_bytes):
    # 2 inputs x 2 pipeline buffers + small output buffers, with headroom.
    # Explicit limit: above v5e's 16 MiB default scoped VMEM, below v7x's
    # 64 MiB physical VMEM.
    vmem_limit = int(min(48 * _MiB, max(24 * _MiB, 6 * block_bytes)))
    return pltpu.CompilerParams(
        dimension_semantics=("parallel",),   # independent tiles -> both v7x TCs
        vmem_limit_bytes=vmem_limit,
    )


def _batch_major_loss(x, t, block_rows):
    """General path: [B, C] row-major, batch-tiled grid, per-row partials."""
    B, C = x.shape
    c_pad = _round_up(C, 128)
    budget = max(8, (_PER_BUFFER_BYTES // (4 * c_pad)) // 8 * 8)
    if block_rows is None:
        block_rows = budget
    block_rows = max(8, _round_up(block_rows, 8))
    if block_rows >= B:
        block_rows = B                       # single block, full batch extent
    grid = (pl.cdiv(B, block_rows),)
    block_bytes = 4 * _round_up(block_rows, 8) * c_pad

    per_row = pl.pallas_call(
        _lsl_batch_major_kernel,
        out_shape=jax.ShapeDtypeStruct((B, 1), jnp.float32),
        grid_spec=pltpu.PrefetchScalarGridSpec(
            num_scalar_prefetch=0,
            grid=grid,
            in_specs=[
                pl.BlockSpec((block_rows, C), lambda i: (i, 0)),
                pl.BlockSpec((block_rows, C), lambda i: (i, 0)),
            ],
            out_specs=pl.BlockSpec((block_rows, 1), lambda i: (i, 0)),
        ),
        compiler_params=_compiler_params(block_bytes),
    )(x, t)
    # Final reduction + (-1/B) in the wrapper: tree-sum is numerically robust
    # and keeps the grid axis free of a shared accumulator.
    return -jnp.mean(per_row)


def _class_major_loss(x, t, block_cols):
    """Tiny-C path: present data as [C, B] so lanes are fully dense."""
    B, C = x.shape
    # TODO(synk): ideally the caller produces class-major [C, B] activations so
    #             these transposes (one extra HBM pass per input) disappear.
    xt = x.T
    tt = t.T
    sub_pad = _round_up(C, 8)
    budget = max(128, (_PER_BUFFER_BYTES // (4 * sub_pad)) // 128 * 128)
    if block_cols is None:
        block_cols = budget
    block_cols = max(128, _round_up(block_cols, 128))
    if block_cols >= B:
        block_cols = B                       # single block, full batch extent
    grid = (pl.cdiv(B, block_cols),)
    block_bytes = 4 * sub_pad * _round_up(block_cols, 128)

    per_col = pl.pallas_call(
        _lsl_class_major_kernel,
        out_shape=jax.ShapeDtypeStruct((1, B), jnp.float32),
        grid_spec=pltpu.PrefetchScalarGridSpec(
            num_scalar_prefetch=0,
            grid=grid,
            in_specs=[
                pl.BlockSpec((C, block_cols), lambda j: (0, j)),
                pl.BlockSpec((C, block_cols), lambda j: (0, j)),
            ],
            out_specs=pl.BlockSpec((1, block_cols), lambda j: (0, j)),
        ),
        compiler_params=_compiler_params(block_bytes),
    )(xt, tt)
    return -jnp.mean(per_col)


def label_smoothing_loss(x, smooth_target, *, layout="auto", block=None):
    """x: [B, C] logits; smooth_target: [B, C] distribution. Returns scalar f32 loss.

    layout: "auto" | "batch_major" | "class_major".
    block : tile rows (batch_major) or tile columns (class_major); None = auto.
    """
    assert x.ndim == 2 and x.shape == smooth_target.shape
    _, C = x.shape
    if layout == "auto":
        layout = "class_major" if C <= 16 else "batch_major"
    if layout == "class_major":
        return _class_major_loss(x, smooth_target, block)
    if layout == "batch_major":
        return _batch_major_loss(x, smooth_target, block)
    raise ValueError(f"unknown layout: {layout!r}")


# ---------------------------------------------------------------------------
# Self-test
# ---------------------------------------------------------------------------

if __name__ == "__main__":
    key = jax.random.PRNGKey(0)
    k1, k2, k3 = jax.random.split(key, 3)

    def make_case(k, B, C, dtype):
        kx, kl = jax.random.split(k)
        x = jax.random.normal(kx, (B, C), dtype=jnp.float32)
        labels = jax.random.randint(kl, (B,), 0, C)
        smoothing = 0.1
        t = jnp.full((B, C), smoothing / (C - 1), dtype=jnp.float32)
        t = t.at[jnp.arange(B), labels].set(1.0 - smoothing)
        return x.astype(dtype), t.astype(dtype)

    def ref_loss(x, t):
        xf = x.astype(jnp.float32)
        tf = t.astype(jnp.float32)
        return -jnp.mean(jnp.sum(tf * jax.nn.log_softmax(xf, axis=1), axis=1))

    # Case 1: the 5-class problem from the training script; B not a multiple of
    # the batch tile so ragged handling is exercised.
    x1, t1 = make_case(k1, 30, 5, jnp.float32)
    ref1 = ref_loss(x1, t1)
    got_auto = label_smoothing_loss(x1, t1)                                 # class-major, lane-dense
    got_bm = label_smoothing_loss(x1, t1, layout="batch_major", block=8)    # 4 tiles, ragged tail
    jax.block_until_ready((got_auto, got_bm))
    assert jnp.allclose(got_auto, ref1, atol=1e-5, rtol=1e-5), (got_auto, ref1)
    assert jnp.allclose(got_bm, ref1, atol=1e-5, rtol=1e-5), (got_bm, ref1)

    # Case 2: tiny C, multi-tile ragged class-major path.
    x2, t2 = make_case(k2, 300, 5, jnp.float32)
    ref2 = ref_loss(x2, t2)
    got2 = label_smoothing_loss(x2, t2, layout="class_major", block=128)
    jax.block_until_ready(got2)
    assert jnp.allclose(got2, ref2, atol=1e-5, rtol=1e-5), (got2, ref2)

    # Case 3: wider C, bf16 inputs, ragged batch-major tiles + auto single tile.
    x3, t3 = make_case(k3, 40, 160, jnp.bfloat16)
    ref3 = ref_loss(x3, t3)
    got3 = label_smoothing_loss(x3, t3, layout="batch_major", block=16)
    got3_auto = label_smoothing_loss(x3, t3)
    jax.block_until_ready((got3, got3_auto))
    assert jnp.allclose(got3, ref3, atol=1e-4, rtol=1e-4), (got3, ref3)
    assert jnp.allclose(got3_auto, ref3, atol=1e-4, rtol=1e-4), (got3_auto, ref3)

    print("KERNEL_OK")
</pallas_src>

<mosaic_0001>
module attributes {stable_mosaic.version = 11 : i64} {
  func.func @_lsl_class_major_kernel(%arg0: i32, %arg1: memref<5x30xf32, #tpu.memory_space<vmem>>, %arg2: memref<5x30xf32, #tpu.memory_space<vmem>>, %arg3: memref<1x30xf32, #tpu.memory_space<vmem>>) attributes {dimension_semantics = [#tpu.dimension_semantics<parallel>], iteration_bounds = array<i64: 1>, scalar_prefetch = 0 : i64, scratch_operands = 0 : i64, tpu.core_type = #tpu.core_type<tc>, window_params = [{transform_indices = @transform_0, window_bounds = array<i64: 5, 30>}, {transform_indices = @transform_1, window_bounds = array<i64: 5, 30>}, {transform_indices = @transform_2, window_bounds = array<i64: 1, 30>}]} {
    %c0 = arith.constant 0 : index
    %c0_0 = arith.constant 0 : index
    %0 = vector.load %arg1[%c0, %c0_0] : memref<5x30xf32, #tpu.memory_space<vmem>>, vector<5x30xf32>
    %c0_1 = arith.constant 0 : index
    %c0_2 = arith.constant 0 : index
    %1 = vector.load %arg2[%c0_1, %c0_2] : memref<5x30xf32, #tpu.memory_space<vmem>>, vector<5x30xf32>
    %cst = arith.constant dense<0xFF800000> : vector<30xf32>
    %2 = vector.multi_reduction <maximumf>, %0, %cst [0] : vector<5x30xf32> to vector<30xf32>
    %3 = vector.shape_cast %2 : vector<30xf32> to vector<1x30xf32>
    %4 = vector.broadcast %3 : vector<1x30xf32> to vector<5x30xf32>
    %5 = arith.subf %0, %4 : vector<5x30xf32>
    %6 = math.exp %5 : vector<5x30xf32>
    %cst_3 = arith.constant dense<0.000000e+00> : vector<30xf32>
    %7 = vector.multi_reduction <add>, %6, %cst_3 [0] : vector<5x30xf32> to vector<30xf32>
    %8 = vector.shape_cast %7 : vector<30xf32> to vector<1x30xf32>
    %9 = math.log %8 : vector<1x30xf32>
    %cst_4 = arith.constant dense<0.000000e+00> : vector<30xf32>
    %10 = vector.multi_reduction <add>, %1, %cst_4 [0] : vector<5x30xf32> to vector<30xf32>
    %11 = vector.shape_cast %10 : vector<30xf32> to vector<1x30xf32>
    %12 = arith.mulf %1, %5 : vector<5x30xf32>
    %cst_5 = arith.constant dense<0.000000e+00> : vector<30xf32>
    %13 = vector.multi_reduction <add>, %12, %cst_5 [0] : vector<5x30xf32> to vector<30xf32>
    %14 = vector.shape_cast %13 : vector<30xf32> to vector<1x30xf32>
    %15 = arith.mulf %9, %11 : vector<1x30xf32>
    %16 = arith.subf %14, %15 : vector<1x30xf32>
    %c0_6 = arith.constant 0 : index
    %c0_7 = arith.constant 0 : index
    %17 = vector.load %arg3[%c0_6, %c0_7] : memref<1x30xf32, #tpu.memory_space<vmem>>, vector<1x30xf32>
    tpu.vector_store %arg3[%c0_6, %c0_7], %16 {strides = array<i32>} : memref<1x30xf32, #tpu.memory_space<vmem>>, vector<1x30xf32>,
    return
  }
  func.func @transform_0(%arg0: i32) -> (i32, i32) {
    %c0_i32 = arith.constant 0 : i32
    %c0_i32_0 = arith.constant 0 : i32
    return %c0_i32, %arg0 : i32, i32
  }
  func.func @transform_1(%arg0: i32) -> (i32, i32) {
    %c0_i32 = arith.constant 0 : i32
    %c0_i32_0 = arith.constant 0 : i32
    return %c0_i32, %arg0 : i32, i32
  }
  func.func @transform_2(%arg0: i32) -> (i32, i32) {
    %c0_i32 = arith.constant 0 : i32
    %c0_i32_0 = arith.constant 0 : i32
    return %c0_i32, %arg0 : i32, i32
  }
}

</mosaic_0001>

<llo_original>
// kernel: tpu_custom_call.1
$region0: #{tpu_custom_call.1}
  #allocation0 [shape = 'u32[]', space=smem, size = 0x4, offset = 0x4, fixed_abs, tag = 'smem constant byte address 0x4 - core index']
  #allocation1 [shape = 'u32[72,128]{1,0:T(1,128)}', space=vmem, size = 0x9000, scoped, tag = 'internal scratch']
  %s0 = inlined_call_operand.hbm [shape: f32[5,30], index: 0, kind: input, shape index: {}]
  %s1 = inlined_call_operand.hbm [shape: f32[5,30], index: 1, kind: input, shape index: {}]
  %s2 = inlined_call_operand.hbm [shape: f32[1,30], index: 2, kind: output, shape index: {}]
  %s3 = sld [smem:[#allocation0]]
  $region26: #{tpu_custom_call.1} parent=0
    _
  %s5 = ssub.s32 1, %s3
  %s6 = scalar_select 0, %s5, %s3
  $region1: #{tpu_custom_call.1} parent=0
    #allocation2 [shape = 'u8[4096]{0}', space=vmem, size = 0x1000, scoped, tag = 'input window, operand 0, single buffered']
    #allocation3 [shape = 's32[1]{0}', space=sflag, size = 0x4, scoped, tag = 'scoped memory for tpu_custom_call.1']
    #allocation4 [shape = 's32[1]{0}', space=sflag, size = 0x4, scoped, tag = 'scoped memory for tpu_custom_call.1']
    #allocation5 [shape = 'u8[4096]{0}', space=vmem, size = 0x1000, scoped, tag = 'input window, operand 1, single buffered']
    #allocation6 [shape = 's32[1]{0}', space=sflag, size = 0x4, scoped, tag = 'scoped memory for tpu_custom_call.1']
    #allocation7 [shape = 'u8[512]{0}', space=vmem, size = 0x400, scoped, tag = 'output window, operand 0, single buffered']
    %7 = vsyncpa [#allocation3], 0
    %8 = vsyncpa [#allocation6], 0
    %9 = vsyncpa [#allocation4], 0
    // Predicated region
    $region2: #{tpu_custom_call.1} parent=1 // pred_check
      _
    $region3: #{tpu_custom_call.1} parent=1 // pred_check_branch
      %11 = sbr.rel (0) target = $region5
    $region4: #{tpu_custom_call.1} parent=1 // pred_region
      %13 = vsyncadd [#allocation3], 0
      %s15 = sshll.u32 %s0, 4
      %s16 = int_to_ptr.hbm [resolvable:$true] %s15
      %s17 = sshll.u32 [#allocation2], 4
      %s18 = int_to_ptr.vmem [resolvable:$true] %s17
      %20 = dma.hbm_to_vmem [thread:$0]  %s16, 128, %s18, [#allocation3]
    $region5: #{tpu_custom_call.1} parent=1 // pred_fallthru
      _
    // Predicated region
    $region6: #{tpu_custom_call.1} parent=1 // pred_check
      _
    $region7: #{tpu_custom_call.1} parent=1 // pred_check_branch
      %22 = sbr.rel (0) target = $region9
    $region8: #{tpu_custom_call.1} parent=1 // pred_region
      %24 = vsyncadd [#allocation6], 0
      %s26 = sshll.u32 %s1, 4
      %s27 = int_to_ptr.hbm [resolvable:$true] %s26
      %s28 = sshll.u32 [#allocation5], 4
      %s29 = int_to_ptr.vmem [resolvable:$true] %s28
      %31 = dma.hbm_to_vmem [thread:$0]  %s27, 128, %s29, [#allocation6]
    $region9: #{tpu_custom_call.1} parent=1 // pred_fallthru
      _
    // Predicated region
    $region10: #{tpu_custom_call.1} parent=1 // pred_check
      _
    $region11: #{tpu_custom_call.1} parent=1 // pred_check_branch
      %33 = sbr.rel (0) target = $region13
    $region12: #{tpu_custom_call.1} parent=1 // pred_region
      %35 = dma.done [#allocation3], 128
    $region13: #{tpu_custom_call.1} parent=1 // pred_fallthru
      _
    // Predicated region
    $region14: #{tpu_custom_call.1} parent=1 // pred_check
      _
    $region15: #{tpu_custom_call.1} parent=1 // pred_check_branch
      %37 = sbr.rel (0) target = $region17
    $region16: #{tpu_custom_call.1} parent=1 // pred_region
      %39 = dma.done [#allocation6], 128
    $region17: #{tpu_custom_call.1} parent=1 // pred_fallthru
      _
    %v40 = vld [vmem:[#allocation2] sm:$0x1f]
    %v41 = vld [vmem:[#allocation5] sm:$0x1f]
    %vm42 = vcmask 241664
    %v43 = vsel %vm42, %v40, -inf
    %v44 = vrot.slane %v43, 4
    %v45 = vmax.f32 %v43, %v44
    %v46 = vrot.slane %v45, 2
    %v47 = vmax.f32 %v45, %v46
    %v48 = vrot.slane %v47, 1
    %v49 = vmax.f32 %v47, %v48
    %v50 = vsub.f32 %v40, %v49
    %v51 = vmul.f32 %v50, 1.442695
    %v52 = vpow.pop %v51
    %v53 = vsel %vm42, %v52, 0.0
    %v54 = vrot.slane %v53, 4
    %v55 = vadd.f32 %v53, %v54
    %v56 = vrot.slane %v55, 2
    %v57 = vadd.f32 %v55, %v56
    %v58 = vrot.slane %v57, 1
    %v59 = vadd.f32 %v57, %v58
    %v60 = vlog2.pop %v59
    %v61 = vmul.f32 %v60, 0.6931472
    %v62 = vsel %vm42, %v41, 0.0
    %v63 = vrot.slane %v62, 4
    %v64 = vadd.f32 %v62, %v63
    %v65 = vrot.slane %v64, 2
    %v66 = vadd.f32 %v64, %v65
    %v67 = vrot.slane %v66, 1
    %v68 = vadd.f32 %v66, %v67
    %v69 = vmul.f32 %v41, %v50
    %v70 = vsel %vm42, %v69, 0.0
    %v71 = vrot.slane %v70, 4
    %v72 = vadd.f32 %v70, %v71
    %v73 = vrot.slane %v72, 2
    %v74 = vadd.f32 %v72, %v73
    %v75 = vrot.slane %v74, 1
    %v76 = vadd.f32 %v74, %v75
    %v77 = vmul.f32 %v61, %v68
    %v78 = vsub.f32 %v76, %v77
    %vm79 = vcmask 237568
    %80 = vst.msk [vmem:[#allocation7] sm:$0x1] %vm79, %v78
    // Predicated region
    $region18: #{tpu_custom_call.1} parent=1 // pred_check
      _
    $region19: #{tpu_custom_call.1} parent=1 // pred_check_branch
      %82 = sbr.rel (0) target = $region21
    $region20: #{tpu_custom_call.1} parent=1 // pred_region
      %84 = vsyncadd [#allocation4], 0
      %s86 = sshll.u32 [#allocation7], 4
      %s87 = int_to_ptr.vmem [resolvable:$true] %s86
      %s88 = sshll.u32 %s2, 4
      %s89 = int_to_ptr.hbm [resolvable:$true] %s88
      %91 = dma.vmem_to_hbm [thread:$0]  %s87, 16, %s89, [#allocation4]
    $region21: #{tpu_custom_call.1} parent=1 // pred_fallthru
      _
    // Predicated region
    $region22: #{tpu_custom_call.1} parent=1 // pred_check
      _
    $region23: #{tpu_custom_call.1} parent=1 // pred_check_branch
      %93 = sbr.rel (0) target = $region25
    $region24: #{tpu_custom_call.1} parent=1 // pred_region
      %95 = dma.done [#allocation4], 16
    $region25: #{tpu_custom_call.1} parent=1 // pred_fallthru
      _
    %96 = vsyncpa [#allocation3], 1
    %97 = vsyncpa [#allocation6], 1
    %98 = vsyncpa [#allocation4], 1

</llo_original>
